<compile_context>
chip_gen: v6e
topology: v6e:2x2x1
jax: 0.10.0
libtpu: 0.0.40
codegen_flags: <defaults>
</compile_context>

<pallas_src>
import functools

import jax
import jax.numpy as jnp
from jax.experimental import pallas as pl
from jax.experimental.pallas import tpu as pltpu


_NEG = -1e9  # plain Python float (finite "-inf"): exp() underflows to exactly 0 in f32


def _distill_loss_kernel(nrows_ref, inv_t_ref, *refs, num_teacher_classes,
                         separate_kl_view):
    if separate_kl_view:
        x_ref, xs_ref, t_ref, lbl_ref, o_ref, acc_ce_ref, acc_kl_ref = refs
    else:
        x_ref, t_ref, lbl_ref, o_ref, acc_ce_ref, acc_kl_ref = refs
        xs_ref = None

    b_idx = pl.program_id(1)
    nb = pl.num_programs(1)

    @pl.when(b_idx == 0)
    def _():
        acc_ce_ref[...] = jnp.zeros_like(acc_ce_ref)
        acc_kl_ref[...] = jnp.zeros_like(acc_kl_ref)

    inv_t = inv_t_ref[0]                              # 1 / temperature (SMEM scalar)
    x = x_ref[...].astype(jnp.float32)                # (bb, C)  student logits
    xs = xs_ref[...].astype(jnp.float32) if separate_kl_view else x   # (bb, Wk)
    t = t_ref[...].astype(jnp.float32)                # (bb, Wk) teacher logits
    labels = lbl_ref[...]                             # (bb, 1)  int32

    bb, C = x.shape
    Wk = t.shape[1]
    Ct = num_teacher_classes

    # Row validity mask: handles the non-divisible batch tail without padding.
    row0 = (pl.program_id(0) * nb + b_idx) * bb
    row_ids = row0 + jax.lax.broadcasted_iota(jnp.int32, (bb, 1), 0)
    row_ok = row_ids < nrows_ref[0]

    # ---- Cross-entropy over all C classes (per-row, summed over valid rows) ----
    class_ids = jax.lax.broadcasted_iota(jnp.int32, (bb, C), 1)
    m = jnp.max(x, axis=-1, keepdims=True)
    z = x - m
    lse = jnp.log(jnp.sum(jnp.exp(z), axis=-1, keepdims=True))                   # (bb, 1)
    z_lbl = jnp.sum(jnp.where(class_ids == labels, z, 0.0), axis=-1, keepdims=True)
    ce_rows = jnp.where(row_ok, lse - z_lbl, 0.0)                                # (bb, 1)

    # ---- KL(teacher || student) over the first Ct classes (width Wk lanes) ----
    kcols = jax.lax.broadcasted_iota(jnp.int32, (bb, Wk), 1)
    kmask = kcols < Ct

    # Student log-softmax over the first Ct classes (lane-masked).
    xp = jnp.where(kmask, xs * inv_t, _NEG)
    pm = jnp.max(xp, axis=-1, keepdims=True)
    pz = xp - pm
    plse = jnp.log(jnp.sum(jnp.exp(pz), axis=-1, keepdims=True))
    log_q = pz - plse                                                            # (bb, Wk)

    # Teacher softmax / log-softmax (padded columns masked out).
    tl = jnp.where(kmask, t * inv_t, _NEG)
    tm = jnp.max(tl, axis=-1, keepdims=True)
    tz = tl - tm
    e_tz = jnp.exp(tz)                           # single EUP pass, reused below
    tsum = jnp.sum(e_tz, axis=-1, keepdims=True)
    p = e_tz * (1.0 / tsum)
    log_p = tz - jnp.log(tsum)

    # Padded columns: p == 0 exactly and (log_p - log_q) finite -> contribute 0.
    kl_rows = jnp.where(
        row_ok, jnp.sum(p * (log_p - log_q), axis=-1, keepdims=True), 0.0)       # (bb, 1)

    acc_ce_ref[...] += ce_rows
    acc_kl_ref[...] += kl_rows

    @pl.when(b_idx == nb - 1)
    def _():
        ce_total = jnp.sum(acc_ce_ref[...])
        kl_total = jnp.sum(acc_kl_ref[...])
        lane = jax.lax.broadcasted_iota(jnp.int32, (1, 1, 2), 2)
        o_ref[...] = jnp.where(lane == 0, ce_total, kl_total)


def _round_up(x, m):
    return ((x + m - 1) // m) * m


def _default_num_partitions():
    """1 on single-TensorCore parts (v5e/v6e/CPU), 2 on dual-TC (v7-class)."""
    try:
        kind = jax.devices()[0].device_kind.lower()
    except Exception:
        return 1
    return 2 if "v7" in kind else 1


def distillation_loss(outputs, labels, teacher_outputs, alpha=0.1, temperature=1.0,
                      *, num_partitions=None, max_block_rows=1024):
    """Pallas implementation of DistillationLoss.forward."""
    B, C = outputs.shape
    Ct = teacher_outputs.shape[1]
    assert 0 < Ct < C, "teacher must have fewer classes than student (num_new_classes > 0)"

    # KL working width: either the full student width, or Ct rounded up to a lane tile.
    Wk = min(C, _round_up(Ct, 128))
    separate_kl_view = Wk < C

    P = int(num_partitions) if num_partitions is not None else _default_num_partitions()
    P = max(1, min(P, pl.cdiv(B, 8)))

    itemsize = jnp.dtype(outputs.dtype).itemsize
    # Double-buffered input blocks + rough count of live f32 temporaries per row.
    in_bytes_row = 2 * itemsize * (C + Wk + (Wk if separate_kl_view else 0))
    tmp_bytes_row = 4 * (2 * C + 5 * Wk)
    budget = 12 << 20                                  # safe on v5e/v6e/v7x scoped VMEM
    cap = max(8, (budget // (in_bytes_row + tmp_bytes_row)) // 8 * 8)

    def _tiles(p):
        bb = max(8, min(cap, _round_up(pl.cdiv(B, p), 8), _round_up(max_block_rows, 8)))
        return bb, pl.cdiv(B, p * bb)

    bb, nb = _tiles(P)
    if P > 1 and P * nb * bb - B >= bb:
        # Would create a fully out-of-bounds row block; fall back to one partition
        # (overshoot is then always < bb, i.e. only a partial, masked tail tile).
        P = 1
        bb, nb = _tiles(P)

    # Teacher padded only to the KL working width (NOT to the student width C).
    teacher_k = (teacher_outputs if Wk == Ct
                 else jnp.pad(teacher_outputs, ((0, 0), (0, Wk - Ct))))
    lbl = labels.astype(jnp.int32).reshape(B, 1)
    nrows = jnp.full((1,), B, dtype=jnp.int32)
    inv_t = (1.0 / jnp.asarray(temperature, jnp.float32)).reshape(1)

    row_map = lambda p, b: (p * nb + b, 0)

    in_specs = [
        pl.BlockSpec(memory_space=pltpu.MemorySpace.SMEM),     # valid-row count
        pl.BlockSpec(memory_space=pltpu.MemorySpace.SMEM),     # 1 / temperature
        pl.BlockSpec((bb, C), row_map),                        # student logits (CE path)
    ]
    inputs = [nrows, inv_t, outputs]
    if separate_kl_view:
        in_specs.append(pl.BlockSpec((bb, Wk), row_map))       # student logits, first Wk cols
        inputs.append(outputs)
    in_specs += [
        pl.BlockSpec((bb, Wk), row_map),                       # teacher logits (width Wk)
        pl.BlockSpec((bb, 1), row_map),                        # labels
    ]
    inputs += [teacher_k, lbl]

    kernel = functools.partial(_distill_loss_kernel,
                               num_teacher_classes=Ct,
                               separate_kl_view=separate_kl_view)

    partials = pl.pallas_call(
        kernel,
        out_shape=jax.ShapeDtypeStruct((P, 1, 2), jnp.float32),
        grid=(P, nb),
        in_specs=in_specs,
        out_specs=pl.BlockSpec((1, 1, 2), lambda p, b: (p, 0, 0)),
        scratch_shapes=[pltpu.VMEM((bb, 1), jnp.float32),      # ce per-row accumulator
                        pltpu.VMEM((bb, 1), jnp.float32)],     # kl per-row accumulator
        compiler_params=pltpu.CompilerParams(
            dimension_semantics=("parallel", "arbitrary"),
            vmem_limit_bytes=32 * 1024 * 1024),
    )(*inputs)

    totals = jnp.sum(partials, axis=(0, 1))          # (2,) = [ce_sum, kl_sum]
    alpha = jnp.asarray(alpha, jnp.float32)
    ce = totals[0] / B
    kl = totals[1] / B
    return (1.0 - alpha) * ce + alpha * kl


def _reference(outputs, labels, teacher_outputs, alpha=0.1, temperature=1.0):
    """Pure-JAX reference mirroring the PyTorch semantics."""
    B, C = outputs.shape
    Ct = teacher_outputs.shape[1]
    logp = jax.nn.log_softmax(outputs, axis=1)
    ce = -jnp.mean(jnp.take_along_axis(logp, labels[:, None], axis=1))
    log_q = jax.nn.log_softmax(outputs[:, :Ct] / temperature, axis=1)
    p = jax.nn.softmax(teacher_outputs / temperature, axis=1)
    log_p = jax.nn.log_softmax(teacher_outputs / temperature, axis=1)
    kl = jnp.sum(p * (log_p - log_q)) / B
    return (1.0 - alpha) * ce + alpha * kl


if __name__ == "__main__":
    def _check(got, want):
        assert jnp.allclose(got, want, rtol=5e-5, atol=5e-5), (got, want)

    # Case 1: small shapes; T != 1, alpha != default.
    k1, k2, k3 = jax.random.split(jax.random.PRNGKey(0), 3)
    B, C, Ct = 8, 32, 24
    outputs = jax.random.normal(k1, (B, C), dtype=jnp.float32)
    teacher = jax.random.normal(k2, (B, Ct), dtype=jnp.float32)
    labels = jax.random.randint(k3, (B,), 0, C, dtype=jnp.int32)
    loss = jax.block_until_ready(
        distillation_loss(outputs, labels, teacher, alpha=0.3, temperature=2.0))
    _check(loss, _reference(outputs, labels, teacher, alpha=0.3, temperature=2.0))

    # Case 2: ragged batch -> exercises the in-kernel row mask (no padding copies).
    k4, k5, k6 = jax.random.split(jax.random.PRNGKey(1), 3)
    B2 = 10
    outputs2 = jax.random.normal(k4, (B2, C), dtype=jnp.float32)
    teacher2 = jax.random.normal(k5, (B2, Ct), dtype=jnp.float32)
    labels2 = jax.random.randint(k6, (B2,), 0, C, dtype=jnp.int32)
    loss2 = jax.block_until_ready(
        distillation_loss(outputs2, labels2, teacher2, alpha=0.1, temperature=1.0))
    _check(loss2, _reference(outputs2, labels2, teacher2, alpha=0.1, temperature=1.0))

    # Case 3: wide student / narrow teacher -> exercises the narrow KL view,
    # plus 2 partitions and a masked partition tail.
    k7, k8, k9 = jax.random.split(jax.random.PRNGKey(2), 3)
    B3, C3, Ct3 = 24, 384, 100
    outputs3 = jax.random.normal(k7, (B3, C3), dtype=jnp.float32)
    teacher3 = jax.random.normal(k8, (B3, Ct3), dtype=jnp.float32)
    labels3 = jax.random.randint(k9, (B3,), 0, C3, dtype=jnp.int32)
    loss3 = jax.block_until_ready(
        distillation_loss(outputs3, labels3, teacher3, alpha=0.25, temperature=3.0,
                          num_partitions=2))
    _check(loss3, _reference(outputs3, labels3, teacher3, alpha=0.25, temperature=3.0))

    print("KERNEL_OK")
</pallas_src>

<mosaic_0001>
module attributes {stable_mosaic.version = 11 : i64} {
  func.func @_distill_loss_kernel(%arg0: i32, %arg1: i32, %arg2: memref<1xi32, #tpu.memory_space<smem>>, %arg3: memref<1xf32, #tpu.memory_space<smem>>, %arg4: memref<8x32xf32, #tpu.memory_space<vmem>>, %arg5: memref<8x32xf32, #tpu.memory_space<vmem>>, %arg6: memref<8x1xi32, #tpu.memory_space<vmem>>, %arg7: memref<1x1x2xf32, #tpu.memory_space<vmem>>, %arg8: memref<8x1xf32, #tpu.memory_space<vmem>>, %arg9: memref<8x1xf32, #tpu.memory_space<vmem>>) attributes {dimension_semantics = [#tpu.dimension_semantics<parallel>, #tpu.dimension_semantics<arbitrary>], iteration_bounds = array<i64: 1, 1>, scalar_prefetch = 0 : i64, scratch_operands = 2 : i64, tpu.core_type = #tpu.core_type<tc>, window_params = [{transform_indices = @transform_0, window_bounds = array<i64: 1>}, {transform_indices = @transform_1, window_bounds = array<i64: 1>}, {transform_indices = @transform_2, window_bounds = array<i64: 8, 32>}, {transform_indices = @transform_3, window_bounds = array<i64: 8, 32>}, {transform_indices = @transform_4, window_bounds = array<i64: 8, 1>}, {transform_indices = @transform_5, window_bounds = array<i64: 1, 1, 2>}]} {
    %c0_i32 = arith.constant 0 : i32
    %0 = arith.cmpi eq, %arg1, %c0_i32 : i32
    %1 = arith.extui %0 : i1 to i32
    %c0_i32_0 = arith.constant 0 : i32
    %2 = arith.cmpi ne, %1, %c0_i32_0 : i32
    scf.if %2 {
      %cst_31 = arith.constant 0.000000e+00 : f32
      %84 = vector.broadcast %cst_31 : f32 to vector<8x1xf32>
      %c0_32 = arith.constant 0 : index
      %c0_33 = arith.constant 0 : index
      %85 = vector.load %arg8[%c0_32, %c0_33] : memref<8x1xf32, #tpu.memory_space<vmem>>, vector<8x1xf32>
      tpu.vector_store %arg8[%c0_32, %c0_33], %84 {strides = array<i32>} : memref<8x1xf32, #tpu.memory_space<vmem>>, vector<8x1xf32>,
      %cst_34 = arith.constant 0.000000e+00 : f32
      %86 = vector.broadcast %cst_34 : f32 to vector<8x1xf32>
      %c0_35 = arith.constant 0 : index
      %c0_36 = arith.constant 0 : index
      %87 = vector.load %arg9[%c0_35, %c0_36] : memref<8x1xf32, #tpu.memory_space<vmem>>, vector<8x1xf32>
      tpu.vector_store %arg9[%c0_35, %c0_36], %86 {strides = array<i32>} : memref<8x1xf32, #tpu.memory_space<vmem>>, vector<8x1xf32>,
    } else {
    }
    %c0 = arith.constant 0 : index
    %3 = memref.load %arg3[%c0] : memref<1xf32, #tpu.memory_space<smem>>
    %c0_1 = arith.constant 0 : index
    %c0_2 = arith.constant 0 : index
    %4 = vector.load %arg4[%c0_1, %c0_2] : memref<8x32xf32, #tpu.memory_space<vmem>>, vector<8x32xf32>
    %c0_3 = arith.constant 0 : index
    %c0_4 = arith.constant 0 : index
    %5 = vector.load %arg5[%c0_3, %c0_4] : memref<8x32xf32, #tpu.memory_space<vmem>>, vector<8x32xf32>
    %c0_5 = arith.constant 0 : index
    %c0_6 = arith.constant 0 : index
    %6 = vector.load %arg6[%c0_5, %c0_6] : memref<8x1xi32, #tpu.memory_space<vmem>>, vector<8x1xi32>
    %c1_i32 = arith.constant 1 : i32
    %7 = arith.muli %arg0, %c1_i32 : i32
    %8 = arith.addi %7, %arg1 : i32
    %c8_i32 = arith.constant 8 : i32
    %9 = arith.muli %8, %c8_i32 : i32
    %10 = tpu.iota {dimensions = array<i32: 0>} : vector<8x1xi32>
    %11 = vector.broadcast %9 : i32 to vector<8x1xi32>
    %12 = arith.addi %11, %10 : vector<8x1xi32>
    %c0_7 = arith.constant 0 : index
    %13 = memref.load %arg2[%c0_7] : memref<1xi32, #tpu.memory_space<smem>>
    %14 = vector.broadcast %13 : i32 to vector<8x1xi32>
    %15 = arith.cmpi slt, %12, %14 : vector<8x1xi32>
    %16 = tpu.iota {dimensions = array<i32: 1>} : vector<8x32xi32>
    %cst = arith.constant dense<0xFF800000> : vector<8xf32>
    %17 = vector.multi_reduction <maximumf>, %4, %cst [1] : vector<8x32xf32> to vector<8xf32>
    %18 = vector.shape_cast %17 : vector<8xf32> to vector<8x1xf32>
    %19 = vector.broadcast %18 : vector<8x1xf32> to vector<8x32xf32>
    %20 = arith.subf %4, %19 : vector<8x32xf32>
    %21 = math.exp %20 : vector<8x32xf32>
    %cst_8 = arith.constant dense<0.000000e+00> : vector<8xf32>
    %22 = vector.multi_reduction <add>, %21, %cst_8 [1] : vector<8x32xf32> to vector<8xf32>
    %23 = vector.shape_cast %22 : vector<8xf32> to vector<8x1xf32>
    %24 = math.log %23 : vector<8x1xf32>
    %25 = vector.broadcast %6 : vector<8x1xi32> to vector<8x32xi32>
    %26 = arith.cmpi eq, %16, %25 : vector<8x32xi32>
    %cst_9 = arith.constant 0.000000e+00 : f32
    %27 = vector.broadcast %cst_9 : f32 to vector<8x32xf32>
    %28 = arith.select %26, %20, %27 : vector<8x32xi1>, vector<8x32xf32>
    %cst_10 = arith.constant dense<0.000000e+00> : vector<8xf32>
    %29 = vector.multi_reduction <add>, %28, %cst_10 [1] : vector<8x32xf32> to vector<8xf32>
    %30 = vector.shape_cast %29 : vector<8xf32> to vector<8x1xf32>
    %31 = arith.subf %24, %30 : vector<8x1xf32>
    %cst_11 = arith.constant 0.000000e+00 : f32
    %32 = vector.broadcast %cst_11 : f32 to vector<8x1xf32>
    %33 = arith.select %15, %31, %32 : vector<8x1xi1>, vector<8x1xf32>
    %34 = tpu.iota {dimensions = array<i32: 1>} : vector<8x32xi32>
    %c24_i32 = arith.constant 24 : i32
    %35 = vector.broadcast %c24_i32 : i32 to vector<8x32xi32>
    %36 = arith.cmpi slt, %34, %35 : vector<8x32xi32>
    %37 = vector.broadcast %3 : f32 to vector<8x32xf32>
    %38 = arith.mulf %4, %37 : vector<8x32xf32>
    %cst_12 = arith.constant -1.000000e+09 : f32
    %39 = vector.broadcast %cst_12 : f32 to vector<8x32xf32>
    %40 = arith.select %36, %38, %39 : vector<8x32xi1>, vector<8x32xf32>
    %cst_13 = arith.constant dense<0xFF800000> : vector<8xf32>
    %41 = vector.multi_reduction <maximumf>, %40, %cst_13 [1] : vector<8x32xf32> to vector<8xf32>
    %42 = vector.shape_cast %41 : vector<8xf32> to vector<8x1xf32>
    %43 = vector.broadcast %42 : vector<8x1xf32> to vector<8x32xf32>
    %44 = arith.subf %40, %43 : vector<8x32xf32>
    %45 = math.exp %44 : vector<8x32xf32>
    %cst_14 = arith.constant dense<0.000000e+00> : vector<8xf32>
    %46 = vector.multi_reduction <add>, %45, %cst_14 [1] : vector<8x32xf32> to vector<8xf32>
    %47 = vector.shape_cast %46 : vector<8xf32> to vector<8x1xf32>
    %48 = math.log %47 : vector<8x1xf32>
    %49 = vector.broadcast %48 : vector<8x1xf32> to vector<8x32xf32>
    %50 = arith.subf %44, %49 : vector<8x32xf32>
    %51 = vector.broadcast %3 : f32 to vector<8x32xf32>
    %52 = arith.mulf %5, %51 : vector<8x32xf32>
    %cst_15 = arith.constant -1.000000e+09 : f32
    %53 = vector.broadcast %cst_15 : f32 to vector<8x32xf32>
    %54 = arith.select %36, %52, %53 : vector<8x32xi1>, vector<8x32xf32>
    %cst_16 = arith.constant dense<0xFF800000> : vector<8xf32>
    %55 = vector.multi_reduction <maximumf>, %54, %cst_16 [1] : vector<8x32xf32> to vector<8xf32>
    %56 = vector.shape_cast %55 : vector<8xf32> to vector<8x1xf32>
    %57 = vector.broadcast %56 : vector<8x1xf32> to vector<8x32xf32>
    %58 = arith.subf %54, %57 : vector<8x32xf32>
    %59 = math.exp %58 : vector<8x32xf32>
    %cst_17 = arith.constant dense<0.000000e+00> : vector<8xf32>
    %60 = vector.multi_reduction <add>, %59, %cst_17 [1] : vector<8x32xf32> to vector<8xf32>
    %61 = vector.shape_cast %60 : vector<8xf32> to vector<8x1xf32>
    %cst_18 = arith.constant 1.000000e+00 : f32
    %62 = vector.broadcast %cst_18 : f32 to vector<8x1xf32>
    %63 = arith.divf %62, %61 : vector<8x1xf32>
    %64 = vector.broadcast %63 : vector<8x1xf32> to vector<8x32xf32>
    %65 = arith.mulf %59, %64 : vector<8x32xf32>
    %66 = math.log %61 : vector<8x1xf32>
    %67 = vector.broadcast %66 : vector<8x1xf32> to vector<8x32xf32>
    %68 = arith.subf %58, %67 : vector<8x32xf32>
    %69 = arith.subf %68, %50 : vector<8x32xf32>
    %70 = arith.mulf %65, %69 : vector<8x32xf32>
    %cst_19 = arith.constant dense<0.000000e+00> : vector<8xf32>
    %71 = vector.multi_reduction <add>, %70, %cst_19 [1] : vector<8x32xf32> to vector<8xf32>
    %72 = vector.shape_cast %71 : vector<8xf32> to vector<8x1xf32>
    %cst_20 = arith.constant 0.000000e+00 : f32
    %73 = vector.broadcast %cst_20 : f32 to vector<8x1xf32>
    %74 = arith.select %15, %72, %73 : vector<8x1xi1>, vector<8x1xf32>
    %c0_21 = arith.constant 0 : index
    %c0_22 = arith.constant 0 : index
    %75 = vector.load %arg8[%c0_21, %c0_22] : memref<8x1xf32, #tpu.memory_space<vmem>>, vector<8x1xf32>
    %76 = arith.addf %75, %33 : vector<8x1xf32>
    %c0_23 = arith.constant 0 : index
    %c0_24 = arith.constant 0 : index
    %77 = vector.load %arg8[%c0_23, %c0_24] : memref<8x1xf32, #tpu.memory_space<vmem>>, vector<8x1xf32>
    tpu.vector_store %arg8[%c0_23, %c0_24], %76 {strides = array<i32>} : memref<8x1xf32, #tpu.memory_space<vmem>>, vector<8x1xf32>,
    %c0_25 = arith.constant 0 : index
    %c0_26 = arith.constant 0 : index
    %78 = vector.load %arg9[%c0_25, %c0_26] : memref<8x1xf32, #tpu.memory_space<vmem>>, vector<8x1xf32>
    %79 = arith.addf %78, %74 : vector<8x1xf32>
    %c0_27 = arith.constant 0 : index
    %c0_28 = arith.constant 0 : index
    %80 = vector.load %arg9[%c0_27, %c0_28] : memref<8x1xf32, #tpu.memory_space<vmem>>, vector<8x1xf32>
    tpu.vector_store %arg9[%c0_27, %c0_28], %79 {strides = array<i32>} : memref<8x1xf32, #tpu.memory_space<vmem>>, vector<8x1xf32>,
    %c0_i32_29 = arith.constant 0 : i32
    %81 = arith.cmpi eq, %arg1, %c0_i32_29 : i32
    %82 = arith.extui %81 : i1 to i32
    %c0_i32_30 = arith.constant 0 : i32
    %83 = arith.cmpi ne, %82, %c0_i32_30 : i32
    scf.if %83 {
      %c0_31 = arith.constant 0 : index
      %c0_32 = arith.constant 0 : index
      %84 = vector.load %arg8[%c0_31, %c0_32] : memref<8x1xf32, #tpu.memory_space<vmem>>, vector<8x1xf32>
      %85 = vector.shape_cast %84 : vector<8x1xf32> to vector<1x8x1xf32>
      %cst_33 = arith.constant dense<0.000000e+00> : vector<1xf32>
      %86 = vector.multi_reduction <add>, %85, %cst_33 [1, 2] : vector<1x8x1xf32> to vector<1xf32>
      %87 = vector.shape_cast %86 : vector<1xf32> to vector<1x1x1xf32>
      %88 = vector.extract %87[0, 0, 0] : f32 from vector<1x1x1xf32>
      %c0_34 = arith.constant 0 : index
      %c0_35 = arith.constant 0 : index
      %89 = vector.load %arg9[%c0_34, %c0_35] : memref<8x1xf32, #tpu.memory_space<vmem>>, vector<8x1xf32>
      %90 = vector.shape_cast %89 : vector<8x1xf32> to vector<1x8x1xf32>
      %cst_36 = arith.constant dense<0.000000e+00> : vector<1xf32>
      %91 = vector.multi_reduction <add>, %90, %cst_36 [1, 2] : vector<1x8x1xf32> to vector<1xf32>
      %92 = vector.shape_cast %91 : vector<1xf32> to vector<1x1x1xf32>
      %93 = vector.extract %92[0, 0, 0] : f32 from vector<1x1x1xf32>
      %94 = tpu.iota {dimensions = array<i32: 2>} : vector<1x1x2xi32>
      %c0_i32_37 = arith.constant 0 : i32
      %95 = vector.broadcast %c0_i32_37 : i32 to vector<1x1x2xi32>
      %96 = arith.cmpi eq, %94, %95 : vector<1x1x2xi32>
      %97 = vector.broadcast %88 : f32 to vector<1x1x2xf32>
      %98 = vector.broadcast %93 : f32 to vector<1x1x2xf32>
      %99 = arith.select %96, %97, %98 : vector<1x1x2xi1>, vector<1x1x2xf32>
      %c0_38 = arith.constant 0 : index
      %c0_39 = arith.constant 0 : index
      %c0_40 = arith.constant 0 : index
      %100 = vector.load %arg7[%c0_38, %c0_39, %c0_40] : memref<1x1x2xf32, #tpu.memory_space<vmem>>, vector<1x1x2xf32>
      tpu.vector_store %arg7[%c0_38, %c0_39, %c0_40], %99 {strides = array<i32>} : memref<1x1x2xf32, #tpu.memory_space<vmem>>, vector<1x1x2xf32>,
    } else {
    }
    return
  }
  func.func @transform_0(%arg0: i32, %arg1: i32) -> i32 {
    %c0_i32 = arith.constant 0 : i32
    %c0_i32_0 = arith.constant 0 : i32
    return %c0_i32 : i32
  }
  func.func @transform_1(%arg0: i32, %arg1: i32) -> i32 {
    %c0_i32 = arith.constant 0 : i32
    %c0_i32_0 = arith.constant 0 : i32
    return %c0_i32 : i32
  }
  func.func @transform_2(%arg0: i32, %arg1: i32) -> (i32, i32) {
    %c1_i32 = arith.constant 1 : i32
    %0 = arith.muli %arg0, %c1_i32 : i32
    %1 = arith.addi %0, %arg1 : i32
    %c0_i32 = arith.constant 0 : i32
    %c0_i32_0 = arith.constant 0 : i32
    return %1, %c0_i32 : i32, i32
  }
  func.func @transform_3(%arg0: i32, %arg1: i32) -> (i32, i32) {
    %c1_i32 = arith.constant 1 : i32
    %0 = arith.muli %arg0, %c1_i32 : i32
    %1 = arith.addi %0, %arg1 : i32
    %c0_i32 = arith.constant 0 : i32
    %c0_i32_0 = arith.constant 0 : i32
    return %1, %c0_i32 : i32, i32
  }
  func.func @transform_4(%arg0: i32, %arg1: i32) -> (i32, i32) {
    %c1_i32 = arith.constant 1 : i32
    %0 = arith.muli %arg0, %c1_i32 : i32
    %1 = arith.addi %0, %arg1 : i32
    %c0_i32 = arith.constant 0 : i32
    %c0_i32_0 = arith.constant 0 : i32
    return %1, %c0_i32 : i32, i32
  }
  func.func @transform_5(%arg0: i32, %arg1: i32) -> (i32, i32, i32) {
    %c0_i32 = arith.constant 0 : i32
    %c0_i32_0 = arith.constant 0 : i32
    %c0_i32_1 = arith.constant 0 : i32
    return %arg0, %c0_i32, %c0_i32_0 : i32, i32, i32
  }
}

</mosaic_0001>

<llo_original>
// kernel: tpu_custom_call.1
$region0: #{tpu_custom_call.1}
  #allocation0 [shape = 'u32[]', space=smem, size = 0x4, offset = 0x4, fixed_abs, tag = 'smem constant byte address 0x4 - core index']
  #allocation1 [shape = 'u32[144,128]{1,0:T(1,128)}', space=vmem, size = 0x12000, scoped, tag = 'internal scratch']
  #allocation2 [shape = 'f32[8,1]{1,0:T(8,128)}', space=vmem, size = 0x1000, scoped, tag = 'scratch operand']
  #allocation3 [shape = 'f32[8,1]{1,0:T(8,128)}', space=vmem, size = 0x1000, scoped, tag = 'scratch operand']
  #allocation4 [shape = 's32[1]{0:T(128)S(6)}', space=smem, size = 0x200, scoped, tag = 'scoped memory for tpu_custom_call.1']
  #allocation5 [shape = 'f32[1]{0:T(128)S(6)}', space=smem, size = 0x200, scoped, tag = 'scoped memory for tpu_custom_call.1']
  %s0 = inlined_call_operand.<no memory space> [shape: s32[1], index: 0, kind: input, shape index: {}]
  %s1 = inlined_call_operand.<no memory space> [shape: f32[1], index: 1, kind: input, shape index: {}]
  %s2 = inlined_call_operand.vmem [shape: f32[8,32], index: 2, kind: input, shape index: {}]
  %s3 = inlined_call_operand.hbm [shape: f32[8,32], index: 3, kind: input, shape index: {}]
  %s4 = inlined_call_operand.vmem [shape: s32[8,1], index: 4, kind: input, shape index: {}]
  %s5 = inlined_call_operand.hbm [shape: f32[1,1,2], index: 5, kind: output, shape index: {}]
  %s6 = sld [smem:[#allocation0]]
  $region42: #{tpu_custom_call.1} parent=0
    _
  %s8 = ssub.s32 1, %s6
  %s9 = scalar_select 0, %s8, %s6
  %10 = sst [smem:[#allocation4]] %s0
  %11 = sst [smem:[#allocation5]] %s1
  $region1: #{tpu_custom_call.1} parent=0
    #allocation6 [shape = 'u8[4096]{0}', space=vmem, size = 0x1000, scoped, tag = 'input window, operand 3, single buffered']
    #allocation7 [shape = 's32[1]{0}', space=sflag, size = 0x4, scoped, tag = 'scoped memory for tpu_custom_call.1']
    #allocation8 [shape = 's32[1]{0}', space=sflag, size = 0x4, scoped, tag = 'scoped memory for tpu_custom_call.1']
    #allocation9 [shape = 'u8[512]{0}', space=vmem, size = 0x400, scoped, tag = 'output window, operand 0, single buffered']
    %12 = vsyncpa [#allocation7], 0
    %13 = vsyncpa [#allocation8], 0
    // Predicated region
    $region2: #{tpu_custom_call.1} parent=1 // pred_check
      _
    $region3: #{tpu_custom_call.1} parent=1 // pred_check_branch
      %15 = sbr.rel (0) target = $region5
    $region4: #{tpu_custom_call.1} parent=1 // pred_region
      _
    $region5: #{tpu_custom_call.1} parent=1 // pred_fallthru
      _
    // Predicated region
    $region6: #{tpu_custom_call.1} parent=1 // pred_check
      _
    $region7: #{tpu_custom_call.1} parent=1 // pred_check_branch
      %17 = sbr.rel (0) target = $region9
    $region8: #{tpu_custom_call.1} parent=1 // pred_region
      _
    $region9: #{tpu_custom_call.1} parent=1 // pred_fallthru
      _
    // Predicated region
    $region10: #{tpu_custom_call.1} parent=1 // pred_check
      _
    $region11: #{tpu_custom_call.1} parent=1 // pred_check_branch
      %19 = sbr.rel (0) target = $region13
    $region12: #{tpu_custom_call.1} parent=1 // pred_region
      %s20 = sadd.s32 0, 0
      %p21 = scmp.lt.s32.totalorder %s20, 0
      %s22 = scalar_select %p21, %s20, 0
      %s23 = smul.addr %s22, 8
      %s24 = scalar_lea.vmem %s2, %s23
      %s25 = sadd.s32 0, 0
    $region13: #{tpu_custom_call.1} parent=1 // pred_fallthru
      _
    // Predicated region
    $region14: #{tpu_custom_call.1} parent=1 // pred_check
      _
    $region15: #{tpu_custom_call.1} parent=1 // pred_check_branch
      %27 = sbr.rel (0) target = $region17
    $region16: #{tpu_custom_call.1} parent=1 // pred_region
      %s28 = sadd.s32 0, 0
      %s30 = ssub.s32 128, 128
      %31 = vsyncadd [#allocation7], %s30
      %s32 = smul.addr %s28, 128
      %s33 = scalar_lea.hbm %s3, %s32
      %s35 = sshll.u32 [#allocation6], 4
      %s36 = int_to_ptr.vmem [resolvable:$true] %s35
      %38 = dma.hbm_to_vmem [thread:$0]  %s33, 128, %s36, [#allocation7]
    $region17: #{tpu_custom_call.1} parent=1 // pred_fallthru
      _
    // Predicated region
    $region18: #{tpu_custom_call.1} parent=1 // pred_check
      _
    $region19: #{tpu_custom_call.1} parent=1 // pred_check_branch
      %40 = sbr.rel (0) target = $region21
    $region20: #{tpu_custom_call.1} parent=1 // pred_region
      %s41 = sadd.s32 0, 0
      %p42 = scmp.lt.s32.totalorder %s41, 0
      %s43 = scalar_select %p42, %s41, 0
      %s44 = smul.addr %s43, 8
      %s45 = scalar_lea.vmem %s4, %s44
      %s46 = sadd.s32 0, 0
    $region21: #{tpu_custom_call.1} parent=1 // pred_fallthru
      _
    // Predicated region
    $region22: #{tpu_custom_call.1} parent=1 // pred_check
      _
    $region23: #{tpu_custom_call.1} parent=1 // pred_check_branch
      %48 = sbr.rel (0) target = $region25
    $region24: #{tpu_custom_call.1} parent=1 // pred_region
      %49 = dma.done [#allocation7], 128
    $region25: #{tpu_custom_call.1} parent=1 // pred_fallthru
      _
    %s50 = sadd.s32 0, 0
    %p51 = scmp.lt.s32.totalorder %s50, 0
    %s52 = scalar_select %p51, %s50, 0
    %s53 = smul.addr %s52, 8
    %s54 = scalar_lea.vmem %s2, %s53
    %s55 = sadd.s32 0, 0
    %p56 = scmp.lt.s32.totalorder %s55, 0
    %s57 = scalar_select %p56, %s55, 0
    %s58 = smul.addr %s57, 8
    %s59 = scalar_lea.vmem %s4, %s58
    %s60 = sadd.s32 0, 0
    %p61 = scmp.lt.s32.totalorder %s60, 0
    %s62 = scalar_select %p61, %s60, 0
    %s63 = smul.addr %s62, 8
    %s64 = scalar_lea.vmem %s2, %s63
    %s65 = sadd.s32 0, 0
    %s66 = sadd.s32 0, 0
    %s67 = sadd.s32 0, 0
    %p68 = scmp.lt.s32.totalorder %s67, 0
    %s69 = scalar_select %p68, %s67, 0
    %s70 = smul.addr %s69, 8
    %s71 = scalar_lea.vmem %s4, %s70
    %s72 = sadd.s32 0, 0
    %p73 = scmp.eq.s32.totalorder 0, 0
    // Predicated region
    $region26: #{tpu_custom_call.1} parent=1 // pred_check
      %p74 = pneg %p73
    $region27: #{tpu_custom_call.1} parent=1 // pred_check_branch
      %76 = sbr.rel (%p74) target = $region29
    $region28: #{tpu_custom_call.1} parent=1 // pred_region
      %vm77 = vcmask 7168
      %78 = vst.msk [vmem:[#allocation2] sm:$0xff] %vm77, 0.0
      %79 = vst.msk [vmem:[#allocation3] sm:$0xff] %vm77, 0.0
    $region29: #{tpu_custom_call.1} parent=1 // pred_fallthru
      _
    %s80 = sld [smem:[#allocation5]]
    %v81 = vld [vmem:[%s64] sm:$0xff]
    %v82 = vld [vmem:[#allocation6] sm:$0xff]
    %v83 = vld [vmem:[%s71] sm:$0xff]
    %s84 = sadd.s32 0, 0
    %s85 = smul.u32 %s84, 8
    %v86 = vlaneseq
    %v87 = vshrl.u32 %v86, 7
    %v88 = vstv %s85
    %v89 = vadd.s32 %v88, %v87
    %s90 = sld [smem:[#allocation4]]
    %v91 = vstv %s90
    %vm92 = vcmp.lt.s32.totalorder %v89, %v91
    %v93 = vlaneseq
    %v94 = vand.u32 %v93, 127
    %vm95 = vcmask 261120
    %v96 = vsel %vm95, %v81, -inf
    %97 = vmax.xlane.f32.xlu0 %v96
    %v98 = vpop.xlane.xlu0 %97
    %v99 = vsub.f32 %v81, %v98
    %v100 = vmul.f32 %v99, 1.442695
    %v101 = vpow.pop %v100
    %v102 = vsel %vm95, %v101, 0.0
    %103 = vadd.xlane.f32.xlu0 %v102
    %v104 = vpop.xlane.xlu0 %103
    %v105 = vlog2.pop %v104
    %v106 = vmul.f32 %v105, 0.6931472
    %107 = vset.pattern.permute.xlu0 0
    %108 = vperm.xlu0 %107, %v83
    %v109 = vpop.permute.xlu0 %108
    %vm110 = vcmp.eq.s32.totalorder %v94, %v109
    %v111 = vsel %vm110, %v99, 0.0
    %v112 = vsel %vm95, %v111, 0.0
    %113 = vadd.xlane.f32.xlu0 %v112
    %v114 = vpop.xlane.xlu0 %113
    %v115 = vsub.f32 %v106, %v114
    %v116 = vsel %vm92, %v115, 0.0
    %vm117 = vcmp.lt.s32.totalorder %v94, 24
    %v118 = vstv %s80
    %v119 = vmul.f32 %v81, %v118
    %v120 = vsel %vm117, %v119, -1e+09
    %v121 = vsel %vm95, %v120, -inf
    %122 = vmax.xlane.f32.xlu0 %v121
    %v123 = vpop.xlane.xlu0 %122
    %v124 = vsub.f32 %v120, %v123
    %v125 = vmul.f32 %v124, 1.442695
    %v126 = vpow.pop %v125
    %v127 = vsel %vm95, %v126, 0.0
    %128 = vadd.xlane.f32.xlu0 %v127
    %v129 = vpop.xlane.xlu0 %128
    %v130 = vlog2.pop %v129
    %v131 = vmul.f32 %v130, 0.6931472
    %v132 = vsub.f32 %v124, %v131
    %v133 = vmul.f32 %v82, %v118
    %v134 = vsel %vm117, %v133, -1e+09
    %v135 = vsel %vm95, %v134, -inf
    %136 = vmax.xlane.f32.xlu0 %v135
    %v137 = vpop.xlane.xlu0 %136
    %v138 = vsub.f32 %v134, %v137
    %v139 = vmul.f32 %v138, 1.442695
    %v140 = vpow.pop %v139
    %v141 = vsel %vm95, %v140, 0.0
    %142 = vadd.xlane.f32.xlu0 %v141
    %v143 = vpop.xlane.xlu0 %142
    %v144 = vrcp.pop %v143
    %v145 = vmul.f32 1.0, %v144
    %v146 = vmul.f32 %v140, %v145
    %v147 = vlog2.pop %v143
    %v148 = vmul.f32 %v147, 0.6931472
    %v149 = vsub.f32 %v138, %v148
    %v150 = vsub.f32 %v149, %v132
    %v151 = vmul.f32 %v146, %v150
    %v152 = vsel %vm95, %v151, 0.0
    %153 = vadd.xlane.f32.xlu0 %v152
    %v154 = vpop.xlane.xlu0 %153
    %v155 = vsel %vm92, %v154, 0.0
    %v156 = vld [vmem:[#allocation2] sm:$0xff]
    %v157 = vadd.f32 %v156, %v116
    %vm158 = vcmask 7168
    %159 = vst.msk [vmem:[#allocation2] sm:$0xff] %vm158, %v157
    %v160 = vld [vmem:[#allocation3] sm:$0xff]
    %v161 = vadd.f32 %v160, %v155
    %162 = vst.msk [vmem:[#allocation3] sm:$0xff] %vm158, %v161
    // Predicated region
    $region30: #{tpu_custom_call.1} parent=1 // pred_check
      %p163 = pneg %p73
    $region31: #{tpu_custom_call.1} parent=1 // pred_check_branch
      %165 = sbr.rel (%p163) target = $region33
    $region32: #{tpu_custom_call.1} parent=1 // pred_region
      %v166 = vld [vmem:[#allocation2] sm:$0xff]
      %v167 = vsel %vm158, %v166, 0.0
      %168 = vadd.xlane.f32.xlu0 %v167
      %v169 = vpop.xlane.xlu0 %168
      %v170 = vrot.slane %v169, 4
      %v171 = vadd.f32 %v169, %v170
      %v172 = vrot.slane %v171, 2
      %v173 = vadd.f32 %v171, %v172
      %v174 = vrot.slane %v173, 1
      %v175 = vadd.f32 %v173, %v174
      %s176 = vtos %v175
      %v177 = vld [vmem:[#allocation3] sm:$0xff]
      %v178 = vsel %vm158, %v177, 0.0
      %179 = vadd.xlane.f32.xlu0 %v178
      %v180 = vpop.xlane.xlu0 %179
      %v181 = vrot.slane %v180, 4
      %v182 = vadd.f32 %v180, %v181
      %v183 = vrot.slane %v182, 2
      %v184 = vadd.f32 %v182, %v183
      %v185 = vrot.slane %v184, 1
      %v186 = vadd.f32 %v184, %v185
      %s187 = vtos %v186
      %vm188 = vcmp.eq.s32.totalorder %v94, 0
      %v189 = vstv %s176
      %v190 = vstv %s187
      %v191 = vsel %vm188, %v189, %v190
      %vm192 = vcmask 8192
      %193 = vst.msk [vmem:[#allocation9] sm:$0x1] %vm192, %v191
    $region33: #{tpu_custom_call.1} parent=1 // pred_fallthru
      _
    // Predicated region
    $region34: #{tpu_custom_call.1} parent=1 // pred_check
      _
    $region35: #{tpu_custom_call.1} parent=1 // pred_check_branch
      %195 = sbr.rel (0) target = $region37
    $region36: #{tpu_custom_call.1} parent=1 // pred_region
      %s197 = ssub.s32 16, 16
      %198 = vsyncadd [#allocation8], %s197
      %s200 = sshll.u32 [#allocation9], 4
      %s201 = int_to_ptr.vmem [resolvable:$true] %s200
      %203 = dma.vmem_to_hbm [thread:$0]  %s201, 16, %s5, [#allocation8]
    $region37: #{tpu_custom_call.1} parent=1 // pred_fallthru
      _
    // Predicated region
    $region38: #{tpu_custom_call.1} parent=1 // pred_check
      _
    $region39: #{tpu_custom_call.1} parent=1 // pred_check_branch
      %205 = sbr.rel (0) target = $region41
    $region40: #{tpu_custom_call.1} parent=1 // pred_region
      %206 = dma.done [#allocation8], 16
    $region41: #{tpu_custom_call.1} parent=1 // pred_fallthru
      _
    %207 = vsyncpa [#allocation7], 1
    %208 = vsyncpa [#allocation8], 1

</llo_original>
